<compile_context>
chip_gen: v7x
topology: tpu7x:2x2x1
jax: 0.10.0
libtpu: 0.0.40
codegen_flags: <defaults>
</compile_context>

<pallas_src>
import math

import jax
import jax.numpy as jnp
from jax.experimental import pallas as pl
from jax.experimental.pallas import tpu as pltpu


# Within v5e/v6e physical VMEM (128 MiB) and v7x physical VMEM (64 MiB),
# above the 16 MiB v5e scoped default so larger tiles don't fail to compile.
VMEM_LIMIT_BYTES = 48 * 1024 * 1024

# Finite "masked" fill: exp(-1e30 - m) underflows to 0, and it is reorder-safe
# (no -inf - -inf = NaN if a row's first visited tile were ever fully masked).
NEG_INF = -1e30


# --------------------------------------------------------------------------- #
# 1) Fused QKV projection -> head-major Q, K, V   [B, H, T, hd]                #
# --------------------------------------------------------------------------- #
def qkv_proj_kernel(x_ref, w_ref, q_ref, k_ref, v_ref):
    # x_ref: (bt, d_in)   w_ref: (H, d_in, 3*hd)   q/k/v_ref: (H, bt, hd)
    x = x_ref[...]                                   # one VMEM read feeds all heads
    num_heads = w_ref.shape[0]
    hd = q_ref.shape[-1]
    for h in range(num_heads):                       # static unroll over heads
        qkv = jnp.dot(x, w_ref[h],                   # one wide N=3*hd MXU push
                      preferred_element_type=jnp.float32)
        q_ref[h] = qkv[:, :hd].astype(q_ref.dtype)
        k_ref[h] = qkv[:, hd:2 * hd].astype(k_ref.dtype)
        v_ref[h] = qkv[:, 2 * hd:3 * hd].astype(v_ref.dtype)


# --------------------------------------------------------------------------- #
# 2) Flash attention (online softmax, causal DMA clamp, diag-only masking)     #
# --------------------------------------------------------------------------- #
def flash_attn_kernel(q_ref, k_ref, v_ref, o_ref, m_ref, l_ref, acc_ref):
    # q_ref: (bq, hd)   k_ref/v_ref: (bk, hd)   o_ref: (bq, hd)
    bq, _ = q_ref.shape
    bk = k_ref.shape[0]

    ki = pl.program_id(3)
    n_kv = pl.num_programs(3)
    q_start = pl.program_id(2) * bq
    kv_start = ki * bk

    @pl.when(ki == 0)
    def _init():
        m_ref[...] = jnp.full_like(m_ref, -jnp.inf)
        l_ref[...] = jnp.zeros_like(l_ref)
        acc_ref[...] = jnp.zeros_like(acc_ref)

    def _tile(masked):
        q = q_ref[...]                               # scale already folded into Wq
        k = k_ref[...]
        # QK^T as a single dot_general (contraction on hd) — no transposes.
        s = jax.lax.dot_general(q, k, (((1,), (1,)), ((), ())),
                                preferred_element_type=jnp.float32)   # (bq, bk) f32
        if masked:
            # One iota-diff compared against a single scalar — only on the
            # diagonal-straddling tiles, not on every kv step.
            diff = (jax.lax.broadcasted_iota(jnp.int32, (bq, bk), 1)
                    - jax.lax.broadcasted_iota(jnp.int32, (bq, bk), 0))
            s = jnp.where(diff > (q_start - kv_start), NEG_INF, s)

        m_prev = m_ref[...]
        m_new = jnp.maximum(m_prev, jnp.max(s, axis=-1, keepdims=True))
        alpha = jnp.exp(m_prev - m_new)
        p = jnp.exp(s - m_new)                       # f32 softmax math (v5e-safe)

        l_ref[...] = alpha * l_ref[...] + jnp.sum(p, axis=-1, keepdims=True)
        acc_ref[...] = alpha * acc_ref[...] + jnp.dot(
            p.astype(v_ref.dtype), v_ref[...],       # probs cast to V dtype for MXU
            preferred_element_type=jnp.float32)
        m_ref[...] = m_new

    # Interior tiles: fully below the diagonal -> no mask work at all.
    @pl.when(kv_start + bk <= q_start + 1)
    def _interior():
        _tile(masked=False)

    # Diagonal-straddling tiles: apply the causal mask.
    @pl.when(jnp.logical_and(kv_start < q_start + bq, kv_start + bk > q_start + 1))
    def _diag():
        _tile(masked=True)

    # Fully-masked tiles (kv_start >= q_start + bq): skipped; their K/V index
    # maps are clamped so no DMA happened either.

    @pl.when(ki == n_kv - 1)
    def _finalize():
        l = l_ref[...]
        inv = pl.reciprocal(l, approx=True)          # EUP slot (free next to exp)
        inv = inv * (2.0 - l * inv)                  # one Newton step -> ~f32 exact
        o_ref[...] = (acc_ref[...] * inv).astype(o_ref.dtype)


# --------------------------------------------------------------------------- #
# 3) Output projection (heads reduced in-register, resident Wo) + bias         #
# --------------------------------------------------------------------------- #
def out_proj_kernel(ctx_ref, wo_ref, bo_ref, o_ref):
    # ctx_ref: (H, bt, hd)   wo_ref: (H, hd, d_out)   bo_ref: (1, d_out)
    # o_ref:  (bt, d_out)  — lane-dense store.
    num_heads = ctx_ref.shape[0]
    acc = jnp.dot(ctx_ref[0], wo_ref[0], preferred_element_type=jnp.float32)
    for h in range(1, num_heads):                    # static unroll over heads
        acc = acc + jnp.dot(ctx_ref[h], wo_ref[h],
                            preferred_element_type=jnp.float32)
    o_ref[...] = (acc + bo_ref[...].astype(jnp.float32)).astype(o_ref.dtype)


# --------------------------------------------------------------------------- #
# Wrapper                                                                      #
# --------------------------------------------------------------------------- #
def multi_head_attention(x, wq, wk, wv, wo, bo, *, num_heads,
                         block_q=None, block_kv=None, block_t=None):
    """x: (B, T, d_in); weights pre-transposed to (in, out); bo: (1, d_out)."""
    B, T, d_in = x.shape
    d_out = wq.shape[1]
    assert d_out % num_heads == 0, "d_out must be divisible by num_heads"
    hd = d_out // num_heads
    dtype = x.dtype

    # Larger default flash blocks (amortize grid-step + rescale overhead);
    # capped at T and required to divide it.
    bq = block_q or min(T, 256)
    bk = block_kv or min(T, 512)
    bt = block_t or min(T, 512)
    assert T % bq == 0 and T % bk == 0 and T % bt == 0

    # One-time parameter plumbing: head-major fused QKV weight, scale folded
    # into the Q third (no O(H*T^2) score scaling inside the attention loop).
    scale = 1.0 / math.sqrt(hd)
    wq_h = (wq * scale).reshape(d_in, num_heads, hd).transpose(1, 0, 2)
    wk_h = wk.reshape(d_in, num_heads, hd).transpose(1, 0, 2)
    wv_h = wv.reshape(d_in, num_heads, hd).transpose(1, 0, 2)
    w_qkv = jnp.concatenate([wq_h, wk_h, wv_h], axis=-1).astype(dtype)  # (H, d_in, 3*hd)
    wo_h = wo.reshape(num_heads, hd, d_out).astype(dtype)               # (H, hd, d_out)
    bo2 = bo.reshape(1, d_out)

    # ---- 1) Fused QKV projections -> head-major [B, H, T, hd] ----
    qkv_out_spec = pl.BlockSpec((None, num_heads, bt, hd), lambda b, t: (b, 0, t, 0))
    q, k, v = pl.pallas_call(
        qkv_proj_kernel,
        out_shape=tuple(jax.ShapeDtypeStruct((B, num_heads, T, hd), dtype)
                        for _ in range(3)),
        grid_spec=pltpu.PrefetchScalarGridSpec(
            num_scalar_prefetch=0,
            grid=(B, T // bt),
            in_specs=[
                pl.BlockSpec((None, bt, d_in), lambda b, t: (b, t, 0)),
                # Constant block index -> weight DMA'd once, stays resident.
                pl.BlockSpec((num_heads, d_in, 3 * hd), lambda b, t: (0, 0, 0)),
            ],
            out_specs=[qkv_out_spec, qkv_out_spec, qkv_out_spec],
        ),
        compiler_params=pltpu.CompilerParams(
            dimension_semantics=("parallel", "parallel"),
            vmem_limit_bytes=VMEM_LIMIT_BYTES),
    )(x, w_qkv)

    # ---- 2) Flash attention -> context, head-major [B, H, T, hd] ----
    def kv_index_map(b, h, qi, ki):
        # Clamp to the last causally-needed K/V block for this q block: steps
        # above the diagonal reuse the previous block -> no DMA for them.
        return (b, h, jnp.minimum(ki, (qi * bq + bq - 1) // bk), 0)

    ctx = pl.pallas_call(
        flash_attn_kernel,
        out_shape=jax.ShapeDtypeStruct((B, num_heads, T, hd), dtype),
        grid_spec=pltpu.PrefetchScalarGridSpec(
            num_scalar_prefetch=0,
            grid=(B, num_heads, T // bq, T // bk),
            in_specs=[
                pl.BlockSpec((None, None, bq, hd), lambda b, h, qi, ki: (b, h, qi, 0)),
                pl.BlockSpec((None, None, bk, hd), kv_index_map),
                pl.BlockSpec((None, None, bk, hd), kv_index_map),
            ],
            out_specs=pl.BlockSpec((None, None, bq, hd),
                                   lambda b, h, qi, ki: (b, h, qi, 0)),
            scratch_shapes=[
                pltpu.VMEM((bq, 1), jnp.float32),    # running max
                pltpu.VMEM((bq, 1), jnp.float32),    # running denom
                pltpu.VMEM((bq, hd), jnp.float32),   # f32 accumulator
            ],
        ),
        compiler_params=pltpu.CompilerParams(
            dimension_semantics=("parallel", "parallel", "parallel", "arbitrary"),
            vmem_limit_bytes=VMEM_LIMIT_BYTES),
    )(q, k, v)

    # ---- 3) Output projection (heads reduced in-kernel, Wo resident) + bias ----
    out = pl.pallas_call(
        out_proj_kernel,
        out_shape=jax.ShapeDtypeStruct((B, T, d_out), dtype),
        grid_spec=pltpu.PrefetchScalarGridSpec(
            num_scalar_prefetch=0,
            grid=(B, T // bt),
            in_specs=[
                pl.BlockSpec((None, num_heads, bt, hd), lambda b, t: (b, 0, t, 0)),
                pl.BlockSpec((num_heads, hd, d_out), lambda b, t: (0, 0, 0)),
                pl.BlockSpec((1, d_out), lambda b, t: (0, 0)),
            ],
            out_specs=pl.BlockSpec((None, bt, d_out), lambda b, t: (b, t, 0)),
        ),
        compiler_params=pltpu.CompilerParams(
            dimension_semantics=("parallel", "parallel"),
            vmem_limit_bytes=VMEM_LIMIT_BYTES),
    )(ctx, wo_h, bo2)

    return out


# --------------------------------------------------------------------------- #
# Plain-JAX reference (mirrors the PyTorch forward, eval mode)                 #
# --------------------------------------------------------------------------- #
def reference_mha(x, wq, wk, wv, wo, bo, *, num_heads):
    B, T, d_in = x.shape
    d_out = wq.shape[1]
    head_dim = d_out // num_heads
    q = (x @ wq).reshape(B, T, num_heads, head_dim).transpose(0, 2, 1, 3)
    k = (x @ wk).reshape(B, T, num_heads, head_dim).transpose(0, 2, 1, 3)
    v = (x @ wv).reshape(B, T, num_heads, head_dim).transpose(0, 2, 1, 3)
    scores = q @ k.transpose(0, 1, 3, 2)
    mask = jnp.triu(jnp.ones((T, T), bool), k=1)
    scores = jnp.where(mask, -jnp.inf, scores)
    w = jax.nn.softmax(scores / math.sqrt(head_dim), axis=-1)
    ctx = (w @ v).transpose(0, 2, 1, 3).reshape(B, T, d_out)
    return ctx @ wo + bo


if __name__ == "__main__":
    def make_params(key, d_in, d_out):
        kq, kk, kv, ko, kb = jax.random.split(key, 5)

        def lin_w(k, fan_in, fan_out):
            bound = 1.0 / math.sqrt(fan_in)
            return jax.random.uniform(k, (fan_in, fan_out), jnp.float32, -bound, bound)

        wq = lin_w(kq, d_in, d_out)      # qkv_bias=False -> no Q/K/V biases
        wk = lin_w(kk, d_in, d_out)
        wv = lin_w(kv, d_in, d_out)
        wo = lin_w(ko, d_out, d_out)
        bo = jax.random.uniform(kb, (1, d_out), jnp.float32,
                                -1.0 / math.sqrt(d_out), 1.0 / math.sqrt(d_out))
        return wq, wk, wv, wo, bo

    key = jax.random.PRNGKey(0)

    # Case 1: small single-tile shapes (same as the module's toy config).
    B, T, d_in, d_out, H = 2, 8, 32, 32, 4
    k1, k2, key = jax.random.split(key, 3)
    x = jax.random.normal(k1, (B, T, d_in), jnp.float32)
    params = make_params(k2, d_in, d_out)
    out = jax.block_until_ready(multi_head_attention(x, *params, num_heads=H))
    ref = reference_mha(x, *params, num_heads=H)
    assert out.shape == (B, T, d_out)
    assert jnp.allclose(out, ref, atol=2e-3, rtol=2e-3), "case1 mismatch vs reference"

    # Case 2: multi-tile flash path (online softmax across kv blocks, clamped
    # K/V index maps, interior/diagonal split) with T=32 and 8x8 q/kv tiles.
    B, T, d_in, d_out, H = 2, 32, 32, 32, 4
    k3, k4, key = jax.random.split(key, 3)
    x = jax.random.normal(k3, (B, T, d_in), jnp.float32)
    params = make_params(k4, d_in, d_out)
    out = jax.block_until_ready(
        multi_head_attention(x, *params, num_heads=H,
                             block_q=8, block_kv=8, block_t=8))
    ref = reference_mha(x, *params, num_heads=H)
    assert out.shape == (B, T, d_out)
    assert jnp.allclose(out, ref, atol=2e-3, rtol=2e-3), "case2 mismatch vs reference"

    # Case 3: rectangular tiles (bq > bk) -> diagonal tiles contain rows that
    # are fully masked in that tile; exercises the finite-fill mask path.
    out = jax.block_until_ready(
        multi_head_attention(x, *params, num_heads=H,
                             block_q=16, block_kv=8, block_t=16))
    assert jnp.allclose(out, ref, atol=2e-3, rtol=2e-3), "case3 mismatch vs reference"

    print("KERNEL_OK")
</pallas_src>

<mosaic_0001>
module attributes {stable_mosaic.version = 11 : i64} {
  func.func @qkv_proj_kernel(%arg0: i32, %arg1: i32, %arg2: memref<1x8x32xf32, #tpu.memory_space<vmem>>, %arg3: memref<4x32x24xf32, #tpu.memory_space<vmem>>, %arg4: memref<1x4x8x8xf32, #tpu.memory_space<vmem>>, %arg5: memref<1x4x8x8xf32, #tpu.memory_space<vmem>>, %arg6: memref<1x4x8x8xf32, #tpu.memory_space<vmem>>) attributes {dimension_semantics = [#tpu.dimension_semantics<parallel>, #tpu.dimension_semantics<parallel>], iteration_bounds = array<i64: 2, 1>, scalar_prefetch = 0 : i64, scratch_operands = 0 : i64, tpu.core_type = #tpu.core_type<tc>, window_params = [{transform_indices = @transform_0, window_bounds = array<i64: 1, 8, 32>}, {pipeline_mode = #tpu.pipeline_mode<synchronous>, transform_indices = @transform_1, window_bounds = array<i64: 4, 32, 24>}, {transform_indices = @transform_2, window_bounds = array<i64: 1, 4, 8, 8>}, {transform_indices = @transform_3, window_bounds = array<i64: 1, 4, 8, 8>}, {transform_indices = @transform_4, window_bounds = array<i64: 1, 4, 8, 8>}]} {
    %c0 = arith.constant 0 : index
    %c0_0 = arith.constant 0 : index
    %c0_1 = arith.constant 0 : index
    %0 = vector.load %arg2[%c0, %c0_0, %c0_1] : memref<1x8x32xf32, #tpu.memory_space<vmem>>, vector<1x8x32xf32>
    %1 = vector.shape_cast %0 : vector<1x8x32xf32> to vector<8x32xf32>
    %c0_2 = arith.constant 0 : index
    %c0_3 = arith.constant 0 : index
    %c0_4 = arith.constant 0 : index
    %2 = vector.load %arg3[%c0_2, %c0_3, %c0_4] : memref<4x32x24xf32, #tpu.memory_space<vmem>>, vector<1x32x24xf32>
    %3 = vector.shape_cast %2 : vector<1x32x24xf32> to vector<32x24xf32>
    %cst = arith.constant dense<0.000000e+00> : vector<8x24xf32>
    %4 = tpu.matmul %1, %3, %cst {dimension_numbers = #tpu.dot_dimension_numbers<[1], [0], [0], [1], [0, 0, 1, 1], [], []>} : vector<8x32xf32>, vector<32x24xf32>, vector<8x24xf32> -> vector<8x24xf32>
    %5 = vector.extract_strided_slice %4 {offsets = [0, 0], sizes = [8, 8], strides = [1, 1]} : vector<8x24xf32> to vector<8x8xf32>
    %c0_5 = arith.constant 0 : index
    %c0_6 = arith.constant 0 : index
    %c0_7 = arith.constant 0 : index
    %c0_8 = arith.constant 0 : index
    %6 = vector.load %arg4[%c0_5, %c0_6, %c0_7, %c0_8] : memref<1x4x8x8xf32, #tpu.memory_space<vmem>>, vector<1x1x8x8xf32>
    %7 = vector.shape_cast %6 : vector<1x1x8x8xf32> to vector<8x8xf32>
    %8 = vector.shape_cast %5 : vector<8x8xf32> to vector<1x1x8x8xf32>
    tpu.vector_store %arg4[%c0_5, %c0_6, %c0_7, %c0_8], %8 {strides = array<i32>} : memref<1x4x8x8xf32, #tpu.memory_space<vmem>>, vector<1x1x8x8xf32>,
    %9 = vector.extract_strided_slice %4 {offsets = [0, 8], sizes = [8, 8], strides = [1, 1]} : vector<8x24xf32> to vector<8x8xf32>
    %c0_9 = arith.constant 0 : index
    %c0_10 = arith.constant 0 : index
    %c0_11 = arith.constant 0 : index
    %c0_12 = arith.constant 0 : index
    %10 = vector.load %arg5[%c0_9, %c0_10, %c0_11, %c0_12] : memref<1x4x8x8xf32, #tpu.memory_space<vmem>>, vector<1x1x8x8xf32>
    %11 = vector.shape_cast %10 : vector<1x1x8x8xf32> to vector<8x8xf32>
    %12 = vector.shape_cast %9 : vector<8x8xf32> to vector<1x1x8x8xf32>
    tpu.vector_store %arg5[%c0_9, %c0_10, %c0_11, %c0_12], %12 {strides = array<i32>} : memref<1x4x8x8xf32, #tpu.memory_space<vmem>>, vector<1x1x8x8xf32>,
    %13 = vector.extract_strided_slice %4 {offsets = [0, 16], sizes = [8, 8], strides = [1, 1]} : vector<8x24xf32> to vector<8x8xf32>
    %c0_13 = arith.constant 0 : index
    %c0_14 = arith.constant 0 : index
    %c0_15 = arith.constant 0 : index
    %c0_16 = arith.constant 0 : index
    %14 = vector.load %arg6[%c0_13, %c0_14, %c0_15, %c0_16] : memref<1x4x8x8xf32, #tpu.memory_space<vmem>>, vector<1x1x8x8xf32>
    %15 = vector.shape_cast %14 : vector<1x1x8x8xf32> to vector<8x8xf32>
    %16 = vector.shape_cast %13 : vector<8x8xf32> to vector<1x1x8x8xf32>
    tpu.vector_store %arg6[%c0_13, %c0_14, %c0_15, %c0_16], %16 {strides = array<i32>} : memref<1x4x8x8xf32, #tpu.memory_space<vmem>>, vector<1x1x8x8xf32>,
    %c1 = arith.constant 1 : index
    %c0_17 = arith.constant 0 : index
    %c0_18 = arith.constant 0 : index
    %17 = vector.load %arg3[%c1, %c0_17, %c0_18] : memref<4x32x24xf32, #tpu.memory_space<vmem>>, vector<1x32x24xf32>
    %18 = vector.shape_cast %17 : vector<1x32x24xf32> to vector<32x24xf32>
    %cst_19 = arith.constant dense<0.000000e+00> : vector<8x24xf32>
    %19 = tpu.matmul %1, %18, %cst_19 {dimension_numbers = #tpu.dot_dimension_numbers<[1], [0], [0], [1], [0, 0, 1, 1], [], []>} : vector<8x32xf32>, vector<32x24xf32>, vector<8x24xf32> -> vector<8x24xf32>
    %20 = vector.extract_strided_slice %19 {offsets = [0, 0], sizes = [8, 8], strides = [1, 1]} : vector<8x24xf32> to vector<8x8xf32>
    %c0_20 = arith.constant 0 : index
    %c1_21 = arith.constant 1 : index
    %c0_22 = arith.constant 0 : index
    %c0_23 = arith.constant 0 : index
    %21 = vector.load %arg4[%c0_20, %c1_21, %c0_22, %c0_23] : memref<1x4x8x8xf32, #tpu.memory_space<vmem>>, vector<1x1x8x8xf32>
    %22 = vector.shape_cast %21 : vector<1x1x8x8xf32> to vector<8x8xf32>
    %23 = vector.shape_cast %20 : vector<8x8xf32> to vector<1x1x8x8xf32>
    tpu.vector_store %arg4[%c0_20, %c1_21, %c0_22, %c0_23], %23 {strides = array<i32>} : memref<1x4x8x8xf32, #tpu.memory_space<vmem>>, vector<1x1x8x8xf32>,
    %24 = vector.extract_strided_slice %19 {offsets = [0, 8], sizes = [8, 8], strides = [1, 1]} : vector<8x24xf32> to vector<8x8xf32>
    %c0_24 = arith.constant 0 : index
    %c1_25 = arith.constant 1 : index
    %c0_26 = arith.constant 0 : index
    %c0_27 = arith.constant 0 : index
    %25 = vector.load %arg5[%c0_24, %c1_25, %c0_26, %c0_27] : memref<1x4x8x8xf32, #tpu.memory_space<vmem>>, vector<1x1x8x8xf32>
    %26 = vector.shape_cast %25 : vector<1x1x8x8xf32> to vector<8x8xf32>
    %27 = vector.shape_cast %24 : vector<8x8xf32> to vector<1x1x8x8xf32>
    tpu.vector_store %arg5[%c0_24, %c1_25, %c0_26, %c0_27], %27 {strides = array<i32>} : memref<1x4x8x8xf32, #tpu.memory_space<vmem>>, vector<1x1x8x8xf32>,
    %28 = vector.extract_strided_slice %19 {offsets = [0, 16], sizes = [8, 8], strides = [1, 1]} : vector<8x24xf32> to vector<8x8xf32>
    %c0_28 = arith.constant 0 : index
    %c1_29 = arith.constant 1 : index
    %c0_30 = arith.constant 0 : index
    %c0_31 = arith.constant 0 : index
    %29 = vector.load %arg6[%c0_28, %c1_29, %c0_30, %c0_31] : memref<1x4x8x8xf32, #tpu.memory_space<vmem>>, vector<1x1x8x8xf32>
    %30 = vector.shape_cast %29 : vector<1x1x8x8xf32> to vector<8x8xf32>
    %31 = vector.shape_cast %28 : vector<8x8xf32> to vector<1x1x8x8xf32>
    tpu.vector_store %arg6[%c0_28, %c1_29, %c0_30, %c0_31], %31 {strides = array<i32>} : memref<1x4x8x8xf32, #tpu.memory_space<vmem>>, vector<1x1x8x8xf32>,
    %c2 = arith.constant 2 : index
    %c0_32 = arith.constant 0 : index
    %c0_33 = arith.constant 0 : index
    %32 = vector.load %arg3[%c2, %c0_32, %c0_33] : memref<4x32x24xf32, #tpu.memory_space<vmem>>, vector<1x32x24xf32>
    %33 = vector.shape_cast %32 : vector<1x32x24xf32> to vector<32x24xf32>
    %cst_34 = arith.constant dense<0.000000e+00> : vector<8x24xf32>
    %34 = tpu.matmul %1, %33, %cst_34 {dimension_numbers = #tpu.dot_dimension_numbers<[1], [0], [0], [1], [0, 0, 1, 1], [], []>} : vector<8x32xf32>, vector<32x24xf32>, vector<8x24xf32> -> vector<8x24xf32>
    %35 = vector.extract_strided_slice %34 {offsets = [0, 0], sizes = [8, 8], strides = [1, 1]} : vector<8x24xf32> to vector<8x8xf32>
    %c0_35 = arith.constant 0 : index
    %c2_36 = arith.constant 2 : index
    %c0_37 = arith.constant 0 : index
    %c0_38 = arith.constant 0 : index
    %36 = vector.load %arg4[%c0_35, %c2_36, %c0_37, %c0_38] : memref<1x4x8x8xf32, #tpu.memory_space<vmem>>, vector<1x1x8x8xf32>
    %37 = vector.shape_cast %36 : vector<1x1x8x8xf32> to vector<8x8xf32>
    %38 = vector.shape_cast %35 : vector<8x8xf32> to vector<1x1x8x8xf32>
    tpu.vector_store %arg4[%c0_35, %c2_36, %c0_37, %c0_38], %38 {strides = array<i32>} : memref<1x4x8x8xf32, #tpu.memory_space<vmem>>, vector<1x1x8x8xf32>,
    %39 = vector.extract_strided_slice %34 {offsets = [0, 8], sizes = [8, 8], strides = [1, 1]} : vector<8x24xf32> to vector<8x8xf32>
    %c0_39 = arith.constant 0 : index
    %c2_40 = arith.constant 2 : index
    %c0_41 = arith.constant 0 : index
    %c0_42 = arith.constant 0 : index
    %40 = vector.load %arg5[%c0_39, %c2_40, %c0_41, %c0_42] : memref<1x4x8x8xf32, #tpu.memory_space<vmem>>, vector<1x1x8x8xf32>
    %41 = vector.shape_cast %40 : vector<1x1x8x8xf32> to vector<8x8xf32>
    %42 = vector.shape_cast %39 : vector<8x8xf32> to vector<1x1x8x8xf32>
    tpu.vector_store %arg5[%c0_39, %c2_40, %c0_41, %c0_42], %42 {strides = array<i32>} : memref<1x4x8x8xf32, #tpu.memory_space<vmem>>, vector<1x1x8x8xf32>,
    %43 = vector.extract_strided_slice %34 {offsets = [0, 16], sizes = [8, 8], strides = [1, 1]} : vector<8x24xf32> to vector<8x8xf32>
    %c0_43 = arith.constant 0 : index
    %c2_44 = arith.constant 2 : index
    %c0_45 = arith.constant 0 : index
    %c0_46 = arith.constant 0 : index
    %44 = vector.load %arg6[%c0_43, %c2_44, %c0_45, %c0_46] : memref<1x4x8x8xf32, #tpu.memory_space<vmem>>, vector<1x1x8x8xf32>
    %45 = vector.shape_cast %44 : vector<1x1x8x8xf32> to vector<8x8xf32>
    %46 = vector.shape_cast %43 : vector<8x8xf32> to vector<1x1x8x8xf32>
    tpu.vector_store %arg6[%c0_43, %c2_44, %c0_45, %c0_46], %46 {strides = array<i32>} : memref<1x4x8x8xf32, #tpu.memory_space<vmem>>, vector<1x1x8x8xf32>,
    %c3 = arith.constant 3 : index
    %c0_47 = arith.constant 0 : index
    %c0_48 = arith.constant 0 : index
    %47 = vector.load %arg3[%c3, %c0_47, %c0_48] : memref<4x32x24xf32, #tpu.memory_space<vmem>>, vector<1x32x24xf32>
    %48 = vector.shape_cast %47 : vector<1x32x24xf32> to vector<32x24xf32>
    %cst_49 = arith.constant dense<0.000000e+00> : vector<8x24xf32>
    %49 = tpu.matmul %1, %48, %cst_49 {dimension_numbers = #tpu.dot_dimension_numbers<[1], [0], [0], [1], [0, 0, 1, 1], [], []>} : vector<8x32xf32>, vector<32x24xf32>, vector<8x24xf32> -> vector<8x24xf32>
    %50 = vector.extract_strided_slice %49 {offsets = [0, 0], sizes = [8, 8], strides = [1, 1]} : vector<8x24xf32> to vector<8x8xf32>
    %c0_50 = arith.constant 0 : index
    %c3_51 = arith.constant 3 : index
    %c0_52 = arith.constant 0 : index
    %c0_53 = arith.constant 0 : index
    %51 = vector.load %arg4[%c0_50, %c3_51, %c0_52, %c0_53] : memref<1x4x8x8xf32, #tpu.memory_space<vmem>>, vector<1x1x8x8xf32>
    %52 = vector.shape_cast %51 : vector<1x1x8x8xf32> to vector<8x8xf32>
    %53 = vector.shape_cast %50 : vector<8x8xf32> to vector<1x1x8x8xf32>
    tpu.vector_store %arg4[%c0_50, %c3_51, %c0_52, %c0_53], %53 {strides = array<i32>} : memref<1x4x8x8xf32, #tpu.memory_space<vmem>>, vector<1x1x8x8xf32>,
    %54 = vector.extract_strided_slice %49 {offsets = [0, 8], sizes = [8, 8], strides = [1, 1]} : vector<8x24xf32> to vector<8x8xf32>
    %c0_54 = arith.constant 0 : index
    %c3_55 = arith.constant 3 : index
    %c0_56 = arith.constant 0 : index
    %c0_57 = arith.constant 0 : index
    %55 = vector.load %arg5[%c0_54, %c3_55, %c0_56, %c0_57] : memref<1x4x8x8xf32, #tpu.memory_space<vmem>>, vector<1x1x8x8xf32>
    %56 = vector.shape_cast %55 : vector<1x1x8x8xf32> to vector<8x8xf32>
    %57 = vector.shape_cast %54 : vector<8x8xf32> to vector<1x1x8x8xf32>
    tpu.vector_store %arg5[%c0_54, %c3_55, %c0_56, %c0_57], %57 {strides = array<i32>} : memref<1x4x8x8xf32, #tpu.memory_space<vmem>>, vector<1x1x8x8xf32>,
    %58 = vector.extract_strided_slice %49 {offsets = [0, 16], sizes = [8, 8], strides = [1, 1]} : vector<8x24xf32> to vector<8x8xf32>
    %c0_58 = arith.constant 0 : index
    %c3_59 = arith.constant 3 : index
    %c0_60 = arith.constant 0 : index
    %c0_61 = arith.constant 0 : index
    %59 = vector.load %arg6[%c0_58, %c3_59, %c0_60, %c0_61] : memref<1x4x8x8xf32, #tpu.memory_space<vmem>>, vector<1x1x8x8xf32>
    %60 = vector.shape_cast %59 : vector<1x1x8x8xf32> to vector<8x8xf32>
    %61 = vector.shape_cast %58 : vector<8x8xf32> to vector<1x1x8x8xf32>
    tpu.vector_store %arg6[%c0_58, %c3_59, %c0_60, %c0_61], %61 {strides = array<i32>} : memref<1x4x8x8xf32, #tpu.memory_space<vmem>>, vector<1x1x8x8xf32>,
    return
  }
  func.func @transform_0(%arg0: i32, %arg1: i32) -> (i32, i32, i32) {
    %c0_i32 = arith.constant 0 : i32
    %c0_i32_0 = arith.constant 0 : i32
    return %arg0, %arg1, %c0_i32 : i32, i32, i32
  }
  func.func @transform_1(%arg0: i32, %arg1: i32) -> (i32, i32, i32) {
    %c0_i32 = arith.constant 0 : i32
    %c0_i32_0 = arith.constant 0 : i32
    %c0_i32_1 = arith.constant 0 : i32
    %c0_i32_2 = arith.constant 0 : i32
    return %c0_i32, %c0_i32_0, %c0_i32_1 : i32, i32, i32
  }
  func.func @transform_2(%arg0: i32, %arg1: i32) -> (i32, i32, i32, i32) {
    %c0_i32 = arith.constant 0 : i32
    %c0_i32_0 = arith.constant 0 : i32
    %c0_i32_1 = arith.constant 0 : i32
    return %arg0, %c0_i32, %arg1, %c0_i32_0 : i32, i32, i32, i32
  }
  func.func @transform_3(%arg0: i32, %arg1: i32) -> (i32, i32, i32, i32) {
    %c0_i32 = arith.constant 0 : i32
    %c0_i32_0 = arith.constant 0 : i32
    %c0_i32_1 = arith.constant 0 : i32
    return %arg0, %c0_i32, %arg1, %c0_i32_0 : i32, i32, i32, i32
  }
  func.func @transform_4(%arg0: i32, %arg1: i32) -> (i32, i32, i32, i32) {
    %c0_i32 = arith.constant 0 : i32
    %c0_i32_0 = arith.constant 0 : i32
    %c0_i32_1 = arith.constant 0 : i32
    return %arg0, %c0_i32, %arg1, %c0_i32_0 : i32, i32, i32, i32
  }
}

</mosaic_0001>

<llo_original>
// kernel: tpu_custom_call.1
$region0: #{tpu_custom_call.1}
  #allocation0 [shape = 'u32[]', space=smem, size = 0x4, offset = 0x4, fixed_abs, tag = 'smem constant byte address 0x4 - core index']
  #allocation1 [shape = 'u32[144,128]{1,0:T(1,128)}', space=vmem, size = 0x12000, scoped, tag = 'internal scratch']
  %s0 = inlined_call_operand.vmem [shape: f32[2,8,32], index: 0, kind: input, shape index: {}]
  %s1 = inlined_call_operand.vmem [shape: f32[4,32,24], index: 1, kind: input, shape index: {}]
  %s2 = inlined_call_operand.hbm [shape: f32[2,4,8,8], index: 2, kind: output, shape index: {0}]
  %s3 = inlined_call_operand.hbm [shape: f32[2,4,8,8], index: 3, kind: output, shape index: {1}]
  %s4 = inlined_call_operand.hbm [shape: f32[2,4,8,8], index: 4, kind: output, shape index: {2}]
  %5 = xla_tuple %s2, %s3, %s4
  %s6 = sld [smem:[#allocation0]]
  $region57: #{tpu_custom_call.1} parent=0
    _
  %s8 = ssub.s32 1, %s6
  %s9 = scalar_select 0, %s8, %s6
  $region1: #{tpu_custom_call.1} parent=0
    #allocation2 [shape = 'u8[32768]{0}', space=vmem, size = 0x8000, scoped, tag = 'output window, operand 0']
    #allocation3 [shape = 's32[2]{0}', space=sflag, size = 0x8, scoped, tag = 'scoped memory for tpu_custom_call.1']
    #allocation4 [shape = 'u8[32768]{0}', space=vmem, size = 0x8000, scoped, tag = 'output window, operand 1']
    #allocation5 [shape = 's32[2]{0}', space=sflag, size = 0x8, scoped, tag = 'scoped memory for tpu_custom_call.1']
    #allocation6 [shape = 'u8[32768]{0}', space=vmem, size = 0x8000, scoped, tag = 'output window, operand 2']
    %10 = vsyncpa [#allocation3], 0
    %s11 = scalar_lea.sflag [#allocation3], 1
    %12 = vsyncpa %s11, 0
    %13 = vsyncpa [#allocation5], 0
    %s14 = scalar_lea.sflag [#allocation5], 1
    %15 = vsyncpa %s14, 0
    loop: start=0, step=1, limit=4
    $region2: #{tpu_custom_call.1} parent=1 // loop_pre_header
      _
    $region3: #{tpu_custom_call.1} parent=1 // loop_header
      %s17 = sphi 0, %s21
      %p18 = scmp.ge.s32.totalorder %s17, 4
      %s24 = sphi 0, %s36
      %s25 = sphi 0, %s32
      %s26 = sphi 0, %s24
      %s27 = sphi 0, %s25
      %s28 = sphi 0, %s26
      %s29 = sphi 0, %s27
      %s41 = sphi 0, %s43
      %s44 = sphi 0, %s41
      %s45 = sphi 0, %s44
      %s61 = sphi 0, %s45
      %s65 = sphi 0, %s65
      %s67 = sphi 0, %s65
      %s68 = sphi 0, %s67
      %s82 = sphi 0, %s68
      %s90 = sphi 0, %s92
      %s93 = sphi 0, %s90
      %s94 = sphi 0, %s93
      %s110 = sphi 0, %s94
      %s118 = sphi 0, %s120
      %s121 = sphi 0, %s118
      %s122 = sphi 0, %s121
      %s138 = sphi 0, %s122
      %s146 = sphi 0, %s148
      %s149 = sphi 0, %s146
      %s150 = sphi 0, %s149
      %s166 = sphi 0, %s150
    $region4: #{tpu_custom_call.1} parent=1 // loop_header_branch
      %20 = sbr.rel (%p18) target = $region8
    $region5: #{tpu_custom_call.1} parent=1 // loop_body
      %s22 = ssub.s32 %s17, 1
      %s23 = ssub.s32 %s17, 2
      %s30 = sadd.s32 1, %s25
      %p31 = scmp.ge.s32.totalorder %s30, 1
      %s32 = scalar_select %p31, 0, %s30
      %s33 = sadd.s32 1, %s24
      %s34 = scalar_select %p31, %s33, %s24
      %p35 = scmp.ge.s32.totalorder %s34, 2
      %s36 = scalar_select %p35, 0, %s34
      %s37 = ssub.s32 %s24, %s36
      %s38 = ssub.s32 %s25, %s32
      %s39 = sor.u32 %s37, %s38
      %p40 = scmp.eq.s32.totalorder %s39, 0
      %s42 = sadd.s32 %s41, 1
      %s43 = scalar_select %p40, %s41, %s42
      %p46 = pneg %p40
      %p47 = scmp.eq.s32.totalorder %s17, 1
      %p48 = por %p46, %p47
      %p49 = scmp.ne.s32.totalorder %s41, %s44
      %p50 = scmp.eq.s32.totalorder %s17, 0
      %p51 = por %p49, %p50
      %p52 = scmp.ne.s32.totalorder %s41, %s44
      %p53 = scmp.eq.s32.totalorder %s22, 1
      %p54 = por %p52, %p53
      %p55 = scmp.ne.s32.totalorder %s44, %s45
      %p56 = scmp.eq.s32.totalorder %s22, 0
      %p57 = por %p55, %p56
      %p58 = scmp.ne.s32.totalorder %s44, %s45
      %p59 = scmp.eq.s32.totalorder %s23, 1
      %p60 = por %p58, %p59
      %p62 = scmp.ne.s32.totalorder %s45, %s61
      %p63 = scmp.eq.s32.totalorder %s23, 0
      %p64 = por %p62, %p63
      %s66 = sadd.s32 %s65, 1
      %p69 = scmp.eq.s32.totalorder %s17, 1
      %p70 = scmp.ne.s32.totalorder %s65, %s67
      %p71 = scmp.eq.s32.totalorder %s17, 0
      %p72 = por %p70, %p71
      %p73 = scmp.ne.s32.totalorder %s65, %s67
      %p74 = scmp.eq.s32.totalorder %s22, 1
      %p75 = por %p73, %p74
      %p76 = scmp.ne.s32.totalorder %s67, %s68
      %p77 = scmp.eq.s32.totalorder %s22, 0
      %p78 = por %p76, %p77
      %p79 = scmp.ne.s32.totalorder %s67, %s68
      %p80 = scmp.eq.s32.totalorder %s23, 1
      %p81 = por %p79, %p80
      %p83 = scmp.ne.s32.totalorder %s68, %s82
      %p84 = scmp.eq.s32.totalorder %s23, 0
      %p85 = por %p83, %p84
      %s86 = ssub.s32 %s24, %s36
      %s87 = ssub.s32 %s25, %s32
      %s88 = sor.u32 %s86, %s87
      %p89 = scmp.eq.s32.totalorder %s88, 0
      %s91 = sadd.s32 %s90, 1
      %s92 = scalar_select %p89, %s90, %s91
      %p95 = pneg %p89
      %p96 = scmp.eq.s32.totalorder %s17, 1
      %p97 = por %p95, %p96
      %p98 = scmp.ne.s32.totalorder %s90, %s93
      %p99 = scmp.eq.s32.totalorder %s17, 0
      %p100 = por %p98, %p99
      %p101 = scmp.ne.s32.totalorder %s90, %s93
      %p102 = scmp.eq.s32.totalorder %s22, 1
      %p103 = por %p101, %p102
      %p104 = scmp.ne.s32.totalorder %s93, %s94
      %p105 = scmp.eq.s32.totalorder %s22, 0
      %p106 = por %p104, %p105
      %p107 = scmp.ne.s32.totalorder %s93, %s94
      %p108 = scmp.eq.s32.totalorder %s23, 1
      %p109 = por %p107, %p108
      %p111 = scmp.ne.s32.totalorder %s94, %s110
      %p112 = scmp.eq.s32.totalorder %s23, 0
      %p113 = por %p111, %p112
      %s114 = ssub.s32 %s24, %s36
      %s115 = ssub.s32 %s25, %s32
      %s116 = sor.u32 %s114, %s115
      %p117 = scmp.eq.s32.totalorder %s116, 0
      %s119 = sadd.s32 %s118, 1
      %s120 = scalar_select %p117, %s118, %s119
      %p123 = pneg %p117
      %p124 = scmp.eq.s32.totalorder %s17, 1
      %p125 = por %p123, %p124
      %p126 = scmp.ne.s32.totalorder %s118, %s121
      %p127 = scmp.eq.s32.totalorder %s17, 0
      %p128 = por %p126, %p127
      %p129 = scmp.ne.s32.totalorder %s118, %s121
      %p130 = scmp.eq.s32.totalorder %s22, 1
      %p131 = por %p129, %p130
      %p132 = scmp.ne.s32.totalorder %s121, %s122
      %p133 = scmp.eq.s32.totalorder %s22, 0
      %p134 = por %p132, %p133
      %p135 = scmp.ne.s32.totalorder %s121, %s122
      %p136 = scmp.eq.s32.totalorder %s23, 1
      %p137 = por %p135, %p136
      %p139 = scmp.ne.s32.totalorder %s122, %s138
      %p140 = scmp.eq.s32.totalorder %s23, 0
      %p141 = por %p139, %p140
      %s142 = ssub.s32 %s24, %s36
      %s143 = ssub.s32 %s25, %s32
      %s144 = sor.u32 %s142, %s143
      %p145 = scmp.eq.s32.totalorder %s144, 0
      %s147 = sadd.s32 %s146, 1
      %s148 = scalar_select %p145, %s146, %s147
      %p151 = pneg %p145
      %p152 = scmp.eq.s32.totalorder %s17, 1
      %p153 = por %p151, %p152
      %p154 = scmp.ne.s32.totalorder %s146, %s149
      %p155 = scmp.eq.s32.totalorder %s17, 0
      %p156 = por %p154, %p155
      %p157 = scmp.ne.s32.totalorder %s146, %s149
      %p158 = scmp.eq.s32.totalorder %s22, 1
      %p159 = por %p157, %p158
      %p160 = scmp.ne.s32.totalorder %s149, %s150
      %p161 = scmp.eq.s32.totalorder %s22, 0
      %p162 = por %p160, %p161
      %p163 = scmp.ne.s32.totalorder %s149, %s150
      %p164 = scmp.eq.s32.totalorder %s23, 1
      %p165 = por %p163, %p164
      %p167 = scmp.ne.s32.totalorder %s150, %s166
      %p168 = scmp.eq.s32.totalorder %s23, 0
      %p169 = por %p167, %p168
      %p170 = scmp.le.s32.totalorder 1, %s17
      %p171 = scmp.lt.s32.totalorder %s17, 3
      %p172 = pnand %p170, %p171
      %p173 = pneg %p172
      // Predicated region
      $region9: #{tpu_custom_call.1} parent=5 // pred_check
        _
      $region10: #{tpu_custom_call.1} parent=5 // pred_check_branch
        %175 = sbr.rel (%p172) target = $region12
      $region11: #{tpu_custom_call.1} parent=5 // pred_region
        %s176 = ssub.s32 %s17, 1
        // Predicated region
        $region13: #{tpu_custom_call.1} parent=11 // pred_check
          %p177 = pneg %p78
        $region14: #{tpu_custom_call.1} parent=11 // pred_check_branch
          %179 = sbr.rel (%p177) target = $region16
        $region15: #{tpu_custom_call.1} parent=11 // pred_region
          _
        $region16: #{tpu_custom_call.1} parent=11 // pred_fallthru
          _
      $region12: #{tpu_custom_call.1} parent=5 // pred_fallthru
        _
      %p180 = scmp.lt.s32.totalorder %s17, 2
      // Predicated region
      $region17: #{tpu_custom_call.1} parent=5 // pred_check
        %p181 = pneg %p180
      $region18: #{tpu_custom_call.1} parent=5 // pred_check_branch
        %183 = sbr.rel (%p181) target = $region20
      $region19: #{tpu_custom_call.1} parent=5 // pred_region
        // Predicated region
        $region21: #{tpu_custom_call.1} parent=19 // pred_check
          %p184 = pneg %p51
        $region22: #{tpu_custom_call.1} parent=19 // pred_check_branch
          %186 = sbr.rel (%p184) target = $region24
        $region23: #{tpu_custom_call.1} parent=19 // pred_region
          %p187 = scmp.lt.s32.totalorder %s24, 1
          %s188 = scalar_select %p187, %s24, 1
          %p189 = scmp.lt.s32.totalorder %s25, 0
          %s190 = scalar_select %p189, %s25, 0
          %s191 = sadd.s32 %s190, %s188
          %s192 = smul.addr %s191, 8
          %s193 = scalar_lea.vmem %s0, %s192
        $region24: #{tpu_custom_call.1} parent=19 // pred_fallthru
          _
      $region20: #{tpu_custom_call.1} parent=5 // pred_fallthru
        _
      %p194 = scmp.le.s32.totalorder 1, %s17
      %p195 = scmp.lt.s32.totalorder %s17, 3
      %p196 = pnand %p194, %p195
      %p197 = pneg %p196
      // Predicated region
      $region25: #{tpu_custom_call.1} parent=5 // pred_check
        _
      $region26: #{tpu_custom_call.1} parent=5 // pred_check_branch
        %199 = sbr.rel (%p196) target = $region28
      $region27: #{tpu_custom_call.1} parent=5 // pred_region
        %s200 = ssub.s32 %s17, 1
        %p201 = scmp.lt.s32.totalorder %s26, 1
        %s202 = scalar_select %p201, %s26, 1
        %p203 = scmp.lt.s32.totalorder %s27, 0
        %s204 = scalar_select %p203, %s27, 0
        %s205 = sadd.s32 %s204, %s202
        %s206 = smul.addr %s205, 8
        %s207 = scalar_lea.vmem %s0, %s206
        %p208 = pneg %p57
        %p209 = pneg %p54
        %p210 = pneg %p78
        %p211 = pneg %p75
        %p212 = pneg %p106
        %p213 = pneg %p103
        %s214 = sand.u32 %s93, 1
        %s215 = scalar_lea.sflag [#allocation3], %s214
        %s216 = sand.u32 %s93, 1
        %s217 = smul.addr %s216, 32
        %s218 = scalar_lea.vmem [#allocation2], %s217
        %p219 = pneg %p134
        %p220 = pneg %p131
        %s221 = sand.u32 %s22, 1
        %s222 = scalar_lea.sflag [#allocation5], %s221
        %s223 = sand.u32 %s121, 1
        %s224 = smul.addr %s223, 32
        %s225 = scalar_lea.vmem [#allocation4], %s224
        %p226 = pneg %p162
        %p227 = pneg %p159
        %s228 = sand.u32 %s22, 1
        %s229 = scalar_lea.sflag [#allocation5], %s228
        %s230 = sand.u32 %s149, 1
        %s231 = smul.addr %s230, 32
        %s232 = scalar_lea.vmem [#allocation6], %s231
        %p233 = scmp.lt.s32.totalorder %s26, 1
        %s234 = scalar_select %p233, %s26, 1
        %p235 = scmp.lt.s32.totalorder %s27, 0
        %s236 = scalar_select %p235, %s27, 0
        %s237 = sadd.s32 %s236, %s234
        %s238 = smul.addr %s237, 8
        %s239 = scalar_lea.vmem %s0, %s238
        %v240 = vld [vmem:[%s239] sm:$0xff]
        %v241 = vld [vmem:[%s1] sm:$0xff]
        %v242 = vld [vmem:[%s1 + $0x8] sm:$0xff]
        %v243 = vld [vmem:[%s1 + $0x10] sm:$0xff]
        %v244 = vld [vmem:[%s1 + $0x18] sm:$0xff]
        %vm245 = vcmask 261120
        %v247 = vsel %vm245, %v240, 0
        %249 = vmatprep.subr.mxu0 0.0
        %250 = vmatpush1.msra.mxu0 %v241
        %251 = vmatprep.subr.mxu0 0.0
        %252 = vmatpush1.msra.mxu0 %v242
        %253 = vmatprep.subr.mxu0 0.0
        %254 = vmatpush1.msra.mxu0 %v243
        %255 = vmatprep.subr.mxu0 0.0
        %256 = vmatpush1.msra.mxu0 %v244
        %257 = vmatprep.subr.mxu0 0.0
        %258 = vmatpush1.msra.mxu0 0.0
        %259 = vmatprep.subr.mxu0 0.0
        %260 = vmatpush1.msra.mxu0 0.0
        %261 = vmatprep.subr.mxu0 0.0
        %262 = vmatpush1.msra.mxu0 0.0
        %263 = vmatprep.subr.mxu0 0.0
        %264 = vmatpush1.msra.mxu0 0.0
        %265 = vmatprep.subr.mxu0 0.0
        %266 = vmatpush1.msra.mxu0 0.0
        %267 = vmatprep.subr.mxu0 0.0
        %268 = vmatpush1.msra.mxu0 0.0
        %269 = vmatprep.subr.mxu0 0.0
        %270 = vmatpush1.msra.mxu0 0.0
        %271 = vmatprep.subr.mxu0 0.0
        %272 = vmatpush1.msra.mxu0 0.0
        %273 = vmatprep.subr.mxu0 0.0
        %274 = vmatpush1.msra.mxu0 0.0
        %275 = vmatprep.subr.mxu0 0.0
        %276 = vmatpush1.msra.mxu0 0.0
        %277 = vmatprep.subr.mxu0 0.0
        %278 = vmatpush1.msra.mxu0 0.0
        %279 = vmatprep.subr.mxu0 0.0
        %280 = vmatpush1.msra.mxu0 0.0
        %281 = vmatprep.subr.mxu0 0.0
        %282 = vmatpush1.msra.mxu0 0.0
        %283 = vmatprep.subr.mxu0 0.0
        %284 = vmatpush1.msra.mxu0 0.0
        %285 = vmatprep.subr.mxu0 0.0
        %286 = vmatpush1.msra.mxu0 0.0
        %287 = vmatprep.subr.mxu0 0.0
        %288 = vmatpush1.msra.mxu0 0.0
        %289 = vmatprep.subr.mxu0 0.0
        %290 = vmatpush1.msra.mxu0 0.0
        %291 = vmatprep.subr.mxu0 0.0
        %292 = vmatpush1.msra.mxu0 0.0
        %293 = vmatprep.subr.mxu0 0.0
        %294 = vmatpush1.msra.mxu0 0.0
        %295 = vmatprep.subr.mxu0 0.0
        %296 = vmatpush1.msra.mxu0 0.0
        %297 = vmatprep.subr.mxu0 0.0
        %298 = vmatpush1.msra.mxu0 0.0
        %299 = vmatprep.subr.mxu0 0.0
        %300 = vmatpush1.msra.mxu0 0.0
        %301 = vmatprep.subr.mxu0 0.0
        %302 = vmatpush1.msra.mxu0 0.0
        %303 = vmatprep.subr.mxu0 0.0
        %304 = vmatpush1.msra.mxu0 0.0
        %305 = vmatprep.subr.mxu0 0.0
        %306 = vmatpush1.msra.mxu0 0.0
        %307 = vmatprep.subr.mxu0 0.0
        %308 = vmatpush1.msra.mxu0 0.0
        %309 = vmatprep.subr.mxu0 0.0
        %310 = vmatpush1.msra.mxu0 0.0
        %311 = vmatprep.subr.mxu0 0.0
        %312 = vmatpush1.msra.mxu0 0.0
        %313 = vmatprep.mubr.f32.mxu0 0.0
        %314 = vmatmul.mubr.f32.gmra.mrb[0].mxu0 %v247
        %v315 = vpop.f32.mrb[0].mxu0
        %v316 = vadd.f32 0.0, %v315
        %v317 = vpop.f32.mrb[0].mxu0
        %318 = vdwg.mxu0
        %vm319 = vcmask 64512
        %320 = vst.msk [vmem:[%s218] sm:$0xff] %vm319, %v316
        %322 = vrot.lane.b32.xlu0 %v316, 120
        %v323 = vpop.permute.xlu0 %322
        %325 = vst.msk [vmem:[%s225] sm:$0xff] %vm319, %v323
        %326 = vrot.lane.b32.xlu0 %v316, 112
        %v327 = vpop.permute.xlu0 %326
        %329 = vst.msk [vmem:[%s232] sm:$0xff] %vm319, %v327
        %s330 = scalar_lea.vmem %s1, 32
        %v331 = vld [vmem:[%s330] sm:$0xff]
        %v332 = vld [vmem:[%s330 + $0x8] sm:$0xff]
        %v333 = vld [vmem:[%s330 + $0x10] sm:$0xff]
        %v334 = vld [vmem:[%s330 + $0x18] sm:$0xff]
        %335 = vmatprep.subr.mxu0 0.0
        %336 = vmatpush1.msra.mxu0 %v331
        %337 = vmatprep.subr.mxu0 0.0
        %338 = vmatpush1.msra.mxu0 %v332
        %339 = vmatprep.subr.mxu0 0.0
        %340 = vmatpush1.msra.mxu0 %v333
        %341 = vmatprep.subr.mxu0 0.0
        %342 = vmatpush1.msra.mxu0 %v334
        %343 = vmatprep.subr.mxu0 0.0
        %344 = vmatpush1.msra.mxu0 0.0
        %345 = vmatprep.subr.mxu0 0.0
        %346 = vmatpush1.msra.mxu0 0.0
        %347 = vmatprep.subr.mxu0 0.0
        %348 = vmatpush1.msra.mxu0 0.0
        %349 = vmatprep.subr.mxu0 0.0
        %350 = vmatpush1.msra.mxu0 0.0
        %351 = vmatprep.subr.mxu0 0.0
        %352 = vmatpush1.msra.mxu0 0.0
        %353 = vmatprep.subr.mxu0 0.0
        %354 = vmatpush1.msra.mxu0 0.0
        %355 = vmatprep.subr.mxu0 0.0
        %356 = vmatpush1.msra.mxu0 0.0
        %357 = vmatprep.subr.mxu0 0.0
        %358 = vmatpush1.msra.mxu0 0.0
        %359 = vmatprep.subr.mxu0 0.0
        %360 = vmatpush1.msra.mxu0 0.0
        %361 = vmatprep.subr.mxu0 0.0
        %362 = vmatpush1.msra.mxu0 0.0
        %363 = vmatprep.subr.mxu0 0.0
        %364 = vmatpush1.msra.mxu0 0.0
        %365 = vmatprep.subr.mxu0 0.0
        %366 = vmatpush1.msra.mxu0 0.0
        %367 = vmatprep.subr.mxu0 0.0
        %368 = vmatpush1.msra.mxu0 0.0
        %369 = vmatprep.subr.mxu0 0.0
        %370 = vmatpush1.msra.mxu0 0.0
        %371 = vmatprep.subr.mxu0 0.0
        %372 = vmatpush1.msra.mxu0 0.0
        %373 = vmatprep.subr.mxu0 0.0
        %374 = vmatpush1.msra.mxu0 0.0
        %375 = vmatprep.subr.mxu0 0.0
        %376 = vmatpush1.msra.mxu0 0.0
        %377 = vmatprep.subr.mxu0 0.0
        %378 = vmatpush1.msra.mxu0 0.0
        %379 = vmatprep.subr.mxu0 0.0
        %380 = vmatpush1.msra.mxu0 0.0
        %381 = vmatprep.subr.mxu0 0.0
        %382 = vmatpush1.msra.mxu0 0.0
        %383 = vmatprep.subr.mxu0 0.0
        %384 = vmatpush1.msra.mxu0 0.0
        %385 = vmatprep.subr.mxu0 0.0
        %386 = vmatpush1.msra.mxu0 0.0
        %387 = vmatprep.subr.mxu0 0.0
        %388 = vmatpush1.msra.mxu0 0.0
        %389 = vmatprep.subr.mxu0 0.0
        %390 = vmatpush1.msra.mxu0 0.0
        %391 = vmatprep.subr.mxu0 0.0
        %392 = vmatpush1.msra.mxu0 0.0
        %393 = vmatprep.subr.mxu0 0.0
        %394 = vmatpush1.msra.mxu0 0.0
        %395 = vmatprep.subr.mxu0 0.0
        %396 = vmatpush1.msra.mxu0 0.0
        %397 = vmatprep.subr.mxu0 0.0
        %398 = vmatpush1.msra.mxu0 0.0
        %399 = vmatprep.mubr.f32.mxu0 0.0
        %400 = vmatmul.mubr.f32.gmra.mrb[0].mxu0 %v247
        %v401 = vpop.f32.mrb[0].mxu0
        %v402 = vadd.f32 0.0, %v401
        %v403 = vpop.f32.mrb[0].mxu0
        %404 = vdwg.mxu0
        %s405 = scalar_lea.vmem %s218, 8 [#allocation2]
        %406 = vst.msk [vmem:[%s405] sm:$0xff] %vm319, %v402
        %408 = vrot.lane.b32.xlu0 %v402, 120
        %v409 = vpop.permute.xlu0 %408
        %s411 = scalar_lea.vmem %s225, 8 [#allocation4]
        %412 = vst.msk [vmem:[%s411] sm:$0xff] %vm319, %v409
        %413 = vrot.lane.b32.xlu0 %v402, 112
        %v414 = vpop.permute.xlu0 %413
        %s416 = scalar_lea.vmem %s232, 8 [#allocation6]
        %417 = vst.msk [vmem:[%s416] sm:$0xff] %vm319, %v414
        %s418 = scalar_lea.vmem %s1, 64
        %v419 = vld [vmem:[%s418] sm:$0xff]
        %v420 = vld [vmem:[%s418 + $0x8] sm:$0xff]
        %v421 = vld [vmem:[%s418 + $0x10] sm:$0xff]
        %v422 = vld [vmem:[%s418 + $0x18] sm:$0xff]
        %423 = vmatprep.subr.mxu0 0.0
        %424 = vmatpush1.msra.mxu0 %v419
        %425 = vmatprep.subr.mxu0 0.0
        %426 = vmatpush1.msra.mxu0 %v420
        %427 = vmatprep.subr.mxu0 0.0
        %428 = vmatpush1.msra.mxu0 %v421
        %429 = vmatprep.subr.mxu0 0.0
        %430 = vmatpush1.msra.mxu0 %v422
        %431 = vmatprep.subr.mxu0 0.0
        %432 = vmatpush1.msra.mxu0 0.0
        %433 = vmatprep.subr.mxu0 0.0
        %434 = vmatpush1.msra.mxu0 0.0
        %435 = vmatprep.subr.mxu0 0.0
        %436 = vmatpush1.msra.mxu0 0.0
        %437 = vmatprep.subr.mxu0 0.0
        %438 = vmatpush1.msra.mxu0 0.0
        %439 = vmatprep.subr.mxu0 0.0
        %440 = vmatpush1.msra.mxu0 0.0
        %441 = vmatprep.subr.mxu0 0.0
        %442 = vmatpush1.msra.mxu0 0.0
        %443 = vmatprep.subr.mxu0 0.0
        %444 = vmatpush1.msra.mxu0 0.0
        %445 = vmatprep.subr.mxu0 0.0
        %446 = vmatpush1.msra.mxu0 0.0
        %447 = vmatprep.subr.mxu0 0.0
        %448 = vmatpush1.msra.mxu0 0.0
        %449 = vmatprep.subr.mxu0 0.0
        %450 = vmatpush1.msra.mxu0 0.0
        %451 = vmatprep.subr.mxu0 0.0
        %452 = vmatpush1.msra.mxu0 0.0
        %453 = vmatprep.subr.mxu0 0.0
        %454 = vmatpush1.msra.mxu0 0.0
        %455 = vmatprep.subr.mxu0 0.0
        %456 = vmatpush1.msra.mxu0 0.0
        %457 = vmatprep.subr.mxu0 0.0
        %458 = vmatpush1.msra.mxu0 0.0
        %459 = vmatprep.subr.mxu0 0.0
        %460 = vmatpush1.msra.mxu0 0.0
        %461 = vmatprep.subr.mxu0 0.0
        %462 = vmatpush1.msra.mxu0 0.0
        %463 = vmatprep.subr.mxu0 0.0
        %464 = vmatpush1.msra.mxu0 0.0
        %465 = vmatprep.subr.mxu0 0.0
        %466 = vmatpush1.msra.mxu0 0.0
        %467 = vmatprep.subr.mxu0 0.0
        %468 = vmatpush1.msra.mxu0 0.0
        %469 = vmatprep.subr.mxu0 0.0
        %470 = vmatpush1.msra.mxu0 0.0
        %471 = vmatprep.subr.mxu0 0.0
        %472 = vmatpush1.msra.mxu0 0.0
        %473 = vmatprep.subr.mxu0 0.0
        %474 = vmatpush1.msra.mxu0 0.0
        %475 = vmatprep.subr.mxu0 0.0
        %476 = vmatpush1.msra.mxu0 0.0
        %477 = vmatprep.subr.mxu0 0.0
        %478 = vmatpush1.msra.mxu0 0.0
        %479 = vmatprep.subr.mxu0 0.0
        %480 = vmatpush1.msra.mxu0 0.0
        %481 = vmatprep.subr.mxu0 0.0
        %482 = vmatpush1.msra.mxu0 0.0
        %483 = vmatprep.subr.mxu0 0.0
        %484 = vmatpush1.msra.mxu0 0.0
        %485 = vmatprep.subr.mxu0 0.0
        %486 = vmatpush1.msra.mxu0 0.0
        %487 = vmatprep.mubr.f32.mxu0 0.0
        %488 = vmatmul.mubr.f32.gmra.mrb[0].mxu0 %v247
        %v489 = vpop.f32.mrb[0].mxu0
        %v490 = vadd.f32 0.0, %v489
        %v491 = vpop.f32.mrb[0].mxu0
        %492 = vdwg.mxu0
        %s493 = scalar_lea.vmem %s218, 16 [#allocation2]
        %494 = vst.msk [vmem:[%s493] sm:$0xff] %vm319, %v490
        %496 = vrot.lane.b32.xlu0 %v490, 120
        %v497 = vpop.permute.xlu0 %496
        %s499 = scalar_lea.vmem %s225, 16 [#allocation4]
        %500 = vst.msk [vmem:[%s499] sm:$0xff] %vm319, %v497
        %501 = vrot.lane.b32.xlu0 %v490, 112
        %v502 = vpop.permute.xlu0 %501
        %s504 = scalar_lea.vmem %s232, 16 [#allocation6]
        %505 = vst.msk [vmem:[%s504] sm:$0xff] %vm319, %v502
        %s506 = scalar_lea.vmem %s1, 96
        %v507 = vld [vmem:[%s506] sm:$0xff]
        %v508 = vld [vmem:[%s506 + $0x8] sm:$0xff]
        %v509 = vld [vmem:[%s506 + $0x10] sm:$0xff]
        %v510 = vld [vmem:[%s506 + $0x18] sm:$0xff]
        %511 = vmatprep.subr.mxu0 0.0
        %512 = vmatpush1.msra.mxu0 %v507
        %513 = vmatprep.subr.mxu0 0.0
        %514 = vmatpush1.msra.mxu0 %v508
        %515 = vmatprep.subr.mxu0 0.0
        %516 = vmatpush1.msra.mxu0 %v509
        %517 = vmatprep.subr.mxu0 0.0
        %518 = vmatpush1.msra.mxu0 %v510
        %519 = vmatprep.subr.mxu0 0.0
        %520 = vmatpush1.msra.mxu0 0.0
        %521 = vmatprep.subr.mxu0 0.0
        %522 = vmatpush1.msra.mxu0 0.0
        %523 = vmatprep.subr.mxu0 0.0
        %524 = vmatpush1.msra.mxu0 0.0
        %525 = vmatprep.subr.mxu0 0.0
        %526 = vmatpush1.msra.mxu0 0.0
        %527 = vmatprep.subr.mxu0 0.0
        %528 = vmatpush1.msra.mxu0 0.0
        %529 = vmatprep.subr.mxu0 0.0
        %530 = vmatpush1.msra.mxu0 0.0
        %531 = vmatprep.subr.mxu0 0.0
        %532 = vmatpush1.msra.mxu0 0.0
        %533 = vmatprep.subr.mxu0 0.0
        %534 = vmatpush1.msra.mxu0 0.0
        %535 = vmatprep.subr.mxu0 0.0
        %536 = vmatpush1.msra.mxu0 0.0
        %537 = vmatprep.subr.mxu0 0.0
        %538 = vmatpush1.msra.mxu0 0.0
        %539 = vmatprep.subr.mxu0 0.0
        %540 = vmatpush1.msra.mxu0 0.0
        %541 = vmatprep.subr.mxu0 0.0
        %542 = vmatpush1.msra.mxu0 0.0
        %543 = vmatprep.subr.mxu0 0.0
        %544 = vmatpush1.msra.mxu0 0.0
        %545 = vmatprep.subr.mxu0 0.0
        %546 = vmatpush1.msra.mxu0 0.0
        %547 = vmatprep.subr.mxu0 0.0
        %548 = vmatpush1.msra.mxu0 0.0
        %549 = vmatprep.subr.mxu0 0.0
        %550 = vmatpush1.msra.mxu0 0.0
        %551 = vmatprep.subr.mxu0 0.0
        %552 = vmatpush1.msra.mxu0 0.0
        %553 = vmatprep.subr.mxu0 0.0
        %554 = vmatpush1.msra.mxu0 0.0
        %555 = vmatprep.subr.mxu0 0.0
        %556 = vmatpush1.msra.mxu0 0.0
        %557 = vmatprep.subr.mxu0 0.0
        %558 = vmatpush1.msra.mxu0 0.0
        %559 = vmatprep.subr.mxu0 0.0
        %560 = vmatpush1.msra.mxu0 0.0
        %561 = vmatprep.subr.mxu0 0.0
        %562 = vmatpush1.msra.mxu0 0.0
        %563 = vmatprep.subr.mxu0 0.0
        %564 = vmatpush1.msra.mxu0 0.0
        %565 = vmatprep.subr.mxu0 0.0
        %566 = vmatpush1.msra.mxu0 0.0
        %567 = vmatprep.subr.mxu0 0.0
        %568 = vmatpush1.msra.mxu0 0.0
        %569 = vmatprep.subr.mxu0 0.0
        %570 = vmatpush1.msra.mxu0 0.0
        %571 = vmatprep.subr.mxu0 0.0
        %572 = vmatpush1.msra.mxu0 0.0
        %573 = vmatprep.subr.mxu0 0.0
        %574 = vmatpush1.msra.mxu0 0.0
        %575 = vmatprep.mubr.f32.mxu0 0.0
        %576 = vmatmul.mubr.f32.gmra.mrb[0].mxu0 %v247
        %v577 = vpop.f32.mrb[0].mxu0
        %v578 = vadd.f32 0.0, %v577
        %v579 = vpop.f32.mrb[0].mxu0
        %580 = vdwg.mxu0
        %s581 = scalar_lea.vmem %s218, 24 [#allocation2]
        %582 = vst.msk [vmem:[%s581] sm:$0xff] %vm319, %v578
        %584 = vrot.lane.b32.xlu0 %v578, 120
        %v585 = vpop.permute.xlu0 %584
        %s587 = scalar_lea.vmem %s225, 24 [#allocation4]
        %588 = vst.msk [vmem:[%s587] sm:$0xff] %vm319, %v585
        %589 = vrot.lane.b32.xlu0 %v578, 112
        %v590 = vpop.permute.xlu0 %589
        %s592 = scalar_lea.vmem %s232, 24 [#allocation6]
        %593 = vst.msk [vmem:[%s592] sm:$0xff] %vm319, %v590
        %s594 = sand.u32 %s93, 1
        %s595 = scalar_lea.sflag [#allocation3], %s594
        %s596 = sand.u32 %s93, 1
        %s597 = smul.addr %s596, 32
        %s598 = scalar_lea.vmem [#allocation2], %s597
        %s599 = sand.u32 %s22, 1
        %s600 = scalar_lea.sflag [#allocation5], %s599
        %s601 = sand.u32 %s121, 1
        %s602 = smul.addr %s601, 32
        %s603 = scalar_lea.vmem [#allocation4], %s602
        %s604 = sand.u32 %s22, 1
        %s605 = scalar_lea.sflag [#allocation5], %s604
        %s606 = sand.u32 %s149, 1
        %s607 = smul.addr %s606, 32
        %s608 = scalar_lea.vmem [#allocation6], %s607
        // Predicated region
        $region29: #{tpu_custom_call.1} parent=27 // pred_check
          %p609 = pneg %p103
        $region30: #{tpu_custom_call.1} parent=27 // pred_check_branch
          %611 = sbr.rel (%p609) target = $region32
        $region31: #{tpu_custom_call.1} parent=27 // pred_region
          %s613 = ssub.s32 512, 512
          %614 = vsyncadd %s595, %s613
          %s615 = smul.addr %s26, 4
          %s616 = sadd.s32 %s27, %s615
          %s617 = smul.addr %s616, 128
          %s618 = scalar_lea.hbm %s2, %s617
          %s619 = sshll.u32 %s598, 4
          %s620 = int_to_ptr.vmem [resolvable:$true] %s619
          %625 = dma.vmem_to_hbm [thread:$0]  %s620, 512, %s618, %s595, 128, 128, 8
        $region32: #{tpu_custom_call.1} parent=27 // pred_fallthru
          _
        // Predicated region
        $region33: #{tpu_custom_call.1} parent=27 // pred_check
          %p626 = pneg %p131
        $region34: #{tpu_custom_call.1} parent=27 // pred_check_branch
          %628 = sbr.rel (%p626) target = $region36
        $region35: #{tpu_custom_call.1} parent=27 // pred_region
          %s630 = ssub.s32 512, 512
          %631 = vsyncadd %s600, %s630
          %s632 = smul.addr %s26, 4
          %s633 = sadd.s32 %s27, %s632
          %s634 = smul.addr %s633, 128
          %s635 = scalar_lea.hbm %s3, %s634
          %s636 = sshll.u32 %s603, 4
          %s637 = int_to_ptr.vmem [resolvable:$true] %s636
          %642 = dma.vmem_to_hbm [thread:$0]  %s637, 512, %s635, %s600, 128, 128, 8
        $region36: #{tpu_custom_call.1} parent=27 // pred_fallthru
          _
        // Predicated region
        $region37: #{tpu_custom_call.1} parent=27 // pred_check
          %p643 = pneg %p159
        $region38: #{tpu_custom_call.1} parent=27 // pred_check_branch
          %645 = sbr.rel (%p643) target = $region40
        $region39: #{tpu_custom_call.1} parent=27 // pred_region
          %s647 = ssub.s32 512, 512
          %648 = vsyncadd %s605, %s647
          %s649 = smul.addr %s26, 4
          %s650 = sadd.s32 %s27, %s649
          %s651 = smul.addr %s650, 128
          %s652 = scalar_lea.hbm %s4, %s651
          %s653 = sshll.u32 %s608, 4
          %s654 = int_to_ptr.vmem [resolvable:$true] %s653
          %659 = dma.vmem_to_hbm [thread:$0]  %s654, 512, %s652, %s605, 128, 128, 8
        $region40: #{tpu_custom_call.1} parent=27 // pred_fallthru
          _
      $region28: #{tpu_custom_call.1} parent=5 // pred_fallthru
        _
      %p660 = scmp.le.s32.totalorder 2, %s17
      // Predicated region
      $region41: #{tpu_custom_call.1} parent=5 // pred_check
        %p661 = pneg %p660
      $region42: #{tpu_custom_call.1} parent=5 // pred_check_branch
        %663 = sbr.rel (%p661) target = $region44
      $region43: #{tpu_custom_call.1} parent=5 // pred_region
        %s664 = ssub.s32 %s17, 2
        // Predicated region
        $region45: #{tpu_custom_call.1} parent=43 // pred_check
          %p665 = pneg %p109
        $region46: #{tpu_custom_call.1} parent=43 // pred_check_branch
          %667 = sbr.rel (%p665) target = $region48
        $region47: #{tpu_custom_call.1} parent=43 // pred_region
          %s668 = sand.u32 %s94, 1
          %s669 = scalar_lea.sflag [#allocation3], %s668
          %s670 = sand.u32 %s94, 1
          %s671 = smul.addr %s670, 32
          %s672 = scalar_lea.vmem [#allocation2], %s671
          %673 = dma.done %s669, 512
        $region48: #{tpu_custom_call.1} parent=43 // pred_fallthru
          _
        // Predicated region
        $region49: #{tpu_custom_call.1} parent=43 // pred_check
          %p674 = pneg %p137
        $region50: #{tpu_custom_call.1} parent=43 // pred_check_branch
          %676 = sbr.rel (%p674) target = $region52
        $region51: #{tpu_custom_call.1} parent=43 // pred_region
          %s677 = sand.u32 %s23, 1
          %s678 = scalar_lea.sflag [#allocation5], %s677
          %s679 = sand.u32 %s122, 1
          %s680 = smul.addr %s679, 32
          %s681 = scalar_lea.vmem [#allocation4], %s680
          %682 = dma.done %s678, 512
        $region52: #{tpu_custom_call.1} parent=43 // pred_fallthru
          _
        // Predicated region
        $region53: #{tpu_custom_call.1} parent=43 // pred_check
          %p683 = pneg %p165
        $region54: #{tpu_custom_call.1} parent=43 // pred_check_branch
          %685 = sbr.rel (%p683) target = $region56
        $region55: #{tpu_custom_call.1} parent=43 // pred_region
          %s686 = sand.u32 %s23, 1
          %s687 = scalar_lea.sflag [#allocation5], %s686
          %s688 = sand.u32 %s150, 1
          %s689 = smul.addr %s688, 32
          %s690 = scalar_lea.vmem [#allocation6], %s689
          %691 = dma.done %s687, 512
        $region56: #{tpu_custom_call.1} parent=43 // pred_fallthru
          _
      $region44: #{tpu_custom_call.1} parent=5 // pred_fallthru
        _
    $region6: #{tpu_custom_call.1} parent=1 // loop_footer
      %s21 = sadd.s32 1, %s17
    $region7: #{tpu_custom_call.1} parent=1 // loop_footer_branch
      %16 = sbr.rel target = $region3
    $region8: #{tpu_custom_call.1} parent=1 // loop_exit
      _
    %692 = vsyncpa [#allocation3], 1
    %s693 = scalar_lea.sflag [#allocation3], 1
    %694 = vsyncpa %s693, 1
    %695 = vsyncpa [#allocation5], 1
    %s696 = scalar_lea.sflag [#allocation5], 1
    %697 = vsyncpa %s696, 1

</llo_original>
